<compile_context>
chip_gen: v6e
topology: v6e:2x2x1
jax: 0.10.0
libtpu: 0.0.40
codegen_flags: <defaults>
</compile_context>

<pallas_src>
import jax
import jax.numpy as jnp
from jax import lax
from jax.experimental import pallas as pl
from jax.experimental.pallas import tpu as pltpu

LANES = 128
SUBLANES = 8
TILE_R = 1024  # rows per grid step; (1024, 128) f32 = 512 KiB per input block


def _focal_elementwise(p, t, *, alpha, gamma, logits):
    """Per-element focal loss in f32, matching the PyTorch module."""
    p = p.astype(jnp.float32)
    t = t.astype(jnp.float32)
    if logits:
        # binary_cross_entropy_with_logits (numerically stable form)
        bce = jnp.maximum(p, 0.0) - p * t + jnp.log1p(jnp.exp(-jnp.abs(p)))
    else:
        # binary_cross_entropy: PyTorch clamps log terms at -100
        log_p = jnp.maximum(jnp.log(p), -100.0)
        log_1mp = jnp.maximum(jnp.log(1.0 - p), -100.0)
        bce = -(t * log_p + (1.0 - t) * log_1mp)
    pt = jnp.exp(-bce)
    one_minus_pt = 1.0 - pt
    g = float(gamma)
    if g == 2.0:
        w = one_minus_pt * one_minus_pt          # VPU mul, no EUP pow
    elif g.is_integer():
        w = lax.integer_pow(one_minus_pt, int(g))
    else:
        w = one_minus_pt ** g
    return alpha * w * bce


def _make_sum_kernel(alpha, gamma, logits):
    def sum_kernel(x_ref, t_ref, psum_ref):
        fl = _focal_elementwise(x_ref[...], t_ref[...],
                                alpha=alpha, gamma=gamma, logits=logits)
        # Sublane-axis partial reduction -> (1, 128); lane sum happens outside
        # on a tiny (num_tiles, 1, 128) array.
        psum_ref[...] = jnp.sum(fl, axis=0, keepdims=True)[None]
    return sum_kernel


def _make_elem_kernel(alpha, gamma, logits):
    def elem_kernel(x_ref, t_ref, o_ref):
        fl = _focal_elementwise(x_ref[...], t_ref[...],
                                alpha=alpha, gamma=gamma, logits=logits)
        o_ref[...] = fl.astype(o_ref.dtype)
    return elem_kernel


def focal_loss(inputs, targets, *, alpha=1.0, gamma=2.0, logits=False, reduce=True):
    """JAX/Pallas equivalent of FocalLoss.forward."""
    assert inputs.shape == targets.shape
    orig_shape = inputs.shape
    n_elem = inputs.size

    rows = pl.cdiv(n_elem, LANES)
    if rows <= TILE_R:
        tile_r = max(SUBLANES, ((rows + SUBLANES - 1) // SUBLANES) * SUBLANES)
    else:
        tile_r = TILE_R
    num_tiles = pl.cdiv(rows, tile_r)
    rows_padded = num_tiles * tile_r
    pad = rows_padded * LANES - n_elem

    x_flat = jnp.ravel(inputs)          # native dtype; cast happens in-kernel
    t_flat = jnp.ravel(targets)
    if pad:
        # Pad with values whose focal loss is exactly 0, so the in-kernel sum
        # needs no masking: (p=1, t=1) for probabilities, (x=40, t=1) for logits.
        pad_x_val = 40.0 if logits else 1.0
        x_flat = jnp.concatenate(
            [x_flat, jnp.full((pad,), pad_x_val, x_flat.dtype)])
        t_flat = jnp.concatenate(
            [t_flat, jnp.full((pad,), 1.0, t_flat.dtype)])
    x2 = x_flat.reshape(rows_padded, LANES)
    t2 = t_flat.reshape(rows_padded, LANES)

    cparams = pltpu.CompilerParams(
        dimension_semantics=("parallel",),
        vmem_limit_bytes=32 * 1024 * 1024,
    )

    in_specs = [pl.BlockSpec((tile_r, LANES), lambda i: (i, 0)),
                pl.BlockSpec((tile_r, LANES), lambda i: (i, 0))]

    if reduce:
        partials = pl.pallas_call(
            _make_sum_kernel(float(alpha), float(gamma), logits),
            out_shape=jax.ShapeDtypeStruct((num_tiles, 1, LANES), jnp.float32),
            grid=(num_tiles,),
            in_specs=in_specs,
            out_specs=pl.BlockSpec((1, 1, LANES), lambda i: (i, 0, 0)),
            compiler_params=cparams,
        )(x2, t2)
        return jnp.sum(partials) / jnp.float32(n_elem)
    else:
        fl2 = pl.pallas_call(
            _make_elem_kernel(float(alpha), float(gamma), logits),
            out_shape=jax.ShapeDtypeStruct((rows_padded, LANES), jnp.float32),
            grid=(num_tiles,),
            in_specs=in_specs,
            out_specs=pl.BlockSpec((tile_r, LANES), lambda i: (i, 0)),
            compiler_params=cparams,
        )(x2, t2)
        fl_flat = fl2.reshape(-1)
        if pad:
            fl_flat = fl_flat[:n_elem]
        return fl_flat.reshape(orig_shape)


def _focal_loss_ref(inputs, targets, alpha=1.0, gamma=2.0, logits=False, reduce=True):
    """Pure-JAX reference mirroring the PyTorch module."""
    p = inputs.astype(jnp.float32)
    t = targets.astype(jnp.float32)
    if logits:
        bce = jnp.maximum(p, 0.0) - p * t + jnp.log1p(jnp.exp(-jnp.abs(p)))
    else:
        bce = -(t * jnp.maximum(jnp.log(p), -100.0)
                + (1.0 - t) * jnp.maximum(jnp.log(1.0 - p), -100.0))
    pt = jnp.exp(-bce)
    fl = alpha * (1.0 - pt) ** gamma * bce
    return jnp.mean(fl) if reduce else fl


if __name__ == "__main__":
    key = jax.random.PRNGKey(0)
    k1, k2, k3, k4 = jax.random.split(key, 4)

    # Small NCHW-shaped activations: probabilities in (0, 1), binary targets.
    shape = (2, 4, 16, 16)
    inputs = jax.random.uniform(k1, shape, jnp.float32, minval=1e-3, maxval=1.0 - 1e-3)
    targets = (jax.random.uniform(k2, shape, jnp.float32) > 0.5).astype(jnp.float32)

    loss = focal_loss(inputs, targets, alpha=1.0, gamma=2.0, logits=False, reduce=True)
    loss = jax.block_until_ready(loss)
    ref = _focal_loss_ref(inputs, targets)
    assert jnp.allclose(loss, ref, rtol=1e-5, atol=1e-6), (loss, ref)

    # Unreduced path.
    fl_map = jax.block_until_ready(focal_loss(inputs, targets, reduce=False))
    ref_map = _focal_loss_ref(inputs, targets, reduce=False)
    assert fl_map.shape == shape
    assert jnp.allclose(fl_map, ref_map, rtol=1e-5, atol=1e-6)

    # Padded (non-lane-multiple) reduce path exercises the zero-loss padding.
    shape2 = (2, 3, 7, 5)  # 210 elements -> needs padding
    inp2 = jax.random.uniform(k3, shape2, jnp.float32, minval=1e-3, maxval=1.0 - 1e-3)
    tgt2 = (jax.random.uniform(k4, shape2, jnp.float32) > 0.5).astype(jnp.float32)
    loss2 = jax.block_until_ready(focal_loss(inp2, tgt2, reduce=True))
    ref2 = _focal_loss_ref(inp2, tgt2)
    assert jnp.allclose(loss2, ref2, rtol=1e-5, atol=1e-6), (loss2, ref2)

    # Logits variant (also padded).
    logit_in = jax.random.normal(k3, shape2, jnp.float32)
    loss3 = jax.block_until_ready(focal_loss(logit_in, tgt2, logits=True, reduce=True))
    ref3 = _focal_loss_ref(logit_in, tgt2, logits=True)
    assert jnp.allclose(loss3, ref3, rtol=1e-5, atol=1e-6), (loss3, ref3)

    print("KERNEL_OK")
</pallas_src>

<mosaic_0001>
module attributes {stable_mosaic.version = 11 : i64} {
  func.func @sum_kernel(%arg0: i32, %arg1: memref<16x128xf32, #tpu.memory_space<vmem>>, %arg2: memref<16x128xf32, #tpu.memory_space<vmem>>, %arg3: memref<1x1x128xf32, #tpu.memory_space<vmem>>) attributes {dimension_semantics = [#tpu.dimension_semantics<parallel>], iteration_bounds = array<i64: 1>, scalar_prefetch = 0 : i64, scratch_operands = 0 : i64, tpu.core_type = #tpu.core_type<tc>, window_params = [{transform_indices = @transform_0, window_bounds = array<i64: 16, 128>}, {transform_indices = @transform_1, window_bounds = array<i64: 16, 128>}, {transform_indices = @transform_2, window_bounds = array<i64: 1, 1, 128>}]} {
    %c0 = arith.constant 0 : index
    %c0_0 = arith.constant 0 : index
    %0 = vector.load %arg1[%c0, %c0_0] : memref<16x128xf32, #tpu.memory_space<vmem>>, vector<16x128xf32>
    %c0_1 = arith.constant 0 : index
    %c0_2 = arith.constant 0 : index
    %1 = vector.load %arg2[%c0_1, %c0_2] : memref<16x128xf32, #tpu.memory_space<vmem>>, vector<16x128xf32>
    %2 = math.log %0 : vector<16x128xf32>
    %cst = arith.constant -1.000000e+02 : f32
    %3 = vector.broadcast %cst : f32 to vector<16x128xf32>
    %4 = arith.maximumf %2, %3 : vector<16x128xf32>
    %cst_3 = arith.constant 1.000000e+00 : f32
    %5 = vector.broadcast %cst_3 : f32 to vector<16x128xf32>
    %6 = arith.subf %5, %0 : vector<16x128xf32>
    %7 = math.log %6 : vector<16x128xf32>
    %cst_4 = arith.constant -1.000000e+02 : f32
    %8 = vector.broadcast %cst_4 : f32 to vector<16x128xf32>
    %9 = arith.maximumf %7, %8 : vector<16x128xf32>
    %10 = arith.mulf %1, %4 : vector<16x128xf32>
    %cst_5 = arith.constant 1.000000e+00 : f32
    %11 = vector.broadcast %cst_5 : f32 to vector<16x128xf32>
    %12 = arith.subf %11, %1 : vector<16x128xf32>
    %13 = arith.mulf %12, %9 : vector<16x128xf32>
    %14 = arith.addf %10, %13 : vector<16x128xf32>
    %cst_6 = arith.constant 0.000000e+00 : f32
    %15 = vector.broadcast %cst_6 : f32 to vector<16x128xf32>
    %16 = arith.subf %15, %14 : vector<16x128xf32>
    %cst_7 = arith.constant 0.000000e+00 : f32
    %17 = vector.broadcast %cst_7 : f32 to vector<16x128xf32>
    %18 = arith.subf %17, %16 : vector<16x128xf32>
    %19 = math.exp %18 : vector<16x128xf32>
    %cst_8 = arith.constant 1.000000e+00 : f32
    %20 = vector.broadcast %cst_8 : f32 to vector<16x128xf32>
    %21 = arith.subf %20, %19 : vector<16x128xf32>
    %22 = arith.mulf %21, %21 : vector<16x128xf32>
    %cst_9 = arith.constant 1.000000e+00 : f32
    %23 = vector.broadcast %cst_9 : f32 to vector<16x128xf32>
    %24 = arith.mulf %23, %22 : vector<16x128xf32>
    %25 = arith.mulf %24, %16 : vector<16x128xf32>
    %cst_10 = arith.constant dense<0.000000e+00> : vector<128xf32>
    %26 = vector.multi_reduction <add>, %25, %cst_10 [0] : vector<16x128xf32> to vector<128xf32>
    %27 = vector.shape_cast %26 : vector<128xf32> to vector<1x128xf32>
    %28 = vector.shape_cast %27 : vector<1x128xf32> to vector<1x1x128xf32>
    %c0_11 = arith.constant 0 : index
    %c0_12 = arith.constant 0 : index
    %c0_13 = arith.constant 0 : index
    %29 = vector.load %arg3[%c0_11, %c0_12, %c0_13] : memref<1x1x128xf32, #tpu.memory_space<vmem>>, vector<1x1x128xf32>
    tpu.vector_store %arg3[%c0_11, %c0_12, %c0_13], %28 {strides = array<i32>} : memref<1x1x128xf32, #tpu.memory_space<vmem>>, vector<1x1x128xf32>,
    return
  }
  func.func @transform_0(%arg0: i32) -> (i32, i32) {
    %c0_i32 = arith.constant 0 : i32
    %c0_i32_0 = arith.constant 0 : i32
    return %arg0, %c0_i32 : i32, i32
  }
  func.func @transform_1(%arg0: i32) -> (i32, i32) {
    %c0_i32 = arith.constant 0 : i32
    %c0_i32_0 = arith.constant 0 : i32
    return %arg0, %c0_i32 : i32, i32
  }
  func.func @transform_2(%arg0: i32) -> (i32, i32, i32) {
    %c0_i32 = arith.constant 0 : i32
    %c0_i32_0 = arith.constant 0 : i32
    %c0_i32_1 = arith.constant 0 : i32
    return %arg0, %c0_i32, %c0_i32_0 : i32, i32, i32
  }
}

</mosaic_0001>

<llo_original>
// kernel: tpu_custom_call.1
$region0: #{tpu_custom_call.1}
  #allocation0 [shape = 'u32[]', space=smem, size = 0x4, offset = 0x4, fixed_abs, tag = 'smem constant byte address 0x4 - core index']
  #allocation1 [shape = 'u32[144,128]{1,0:T(1,128)}', space=vmem, size = 0x12000, scoped, tag = 'internal scratch']
  %s0 = inlined_call_operand.hbm [shape: f32[16,128], index: 0, kind: input, shape index: {}]
  %s1 = inlined_call_operand.hbm [shape: f32[16,128], index: 1, kind: input, shape index: {}]
  %s2 = inlined_call_operand.hbm [shape: f32[1,1,128], index: 2, kind: output, shape index: {}]
  %s3 = sld [smem:[#allocation0]]
  $region26: #{tpu_custom_call.1} parent=0
    _
  %s5 = ssub.s32 1, %s3
  %s6 = scalar_select 0, %s5, %s3
  $region1: #{tpu_custom_call.1} parent=0
    #allocation2 [shape = 'u8[8192]{0}', space=vmem, size = 0x2000, scoped, tag = 'input window, operand 0, single buffered']
    #allocation3 [shape = 's32[1]{0}', space=sflag, size = 0x4, scoped, tag = 'scoped memory for tpu_custom_call.1']
    #allocation4 [shape = 's32[1]{0}', space=sflag, size = 0x4, scoped, tag = 'scoped memory for tpu_custom_call.1']
    #allocation5 [shape = 'u8[8192]{0}', space=vmem, size = 0x2000, scoped, tag = 'input window, operand 1, single buffered']
    #allocation6 [shape = 's32[1]{0}', space=sflag, size = 0x4, scoped, tag = 'scoped memory for tpu_custom_call.1']
    #allocation7 [shape = 'u8[512]{0}', space=vmem, size = 0x400, scoped, tag = 'output window, operand 0, single buffered']
    %7 = vsyncpa [#allocation3], 0
    %8 = vsyncpa [#allocation6], 0
    %9 = vsyncpa [#allocation4], 0
    // Predicated region
    $region2: #{tpu_custom_call.1} parent=1 // pred_check
      _
    $region3: #{tpu_custom_call.1} parent=1 // pred_check_branch
      %11 = sbr.rel (0) target = $region5
    $region4: #{tpu_custom_call.1} parent=1 // pred_region
      %s13 = ssub.s32 256, 256
      %14 = vsyncadd [#allocation3], %s13
      %s15 = sshll.u32 [#allocation2], 4
      %s16 = int_to_ptr.vmem [resolvable:$true] %s15
      %21 = dma.hbm_to_vmem [thread:$0]  %s0, 256, %s16, [#allocation3], 128, 128, 8
    $region5: #{tpu_custom_call.1} parent=1 // pred_fallthru
      _
    // Predicated region
    $region6: #{tpu_custom_call.1} parent=1 // pred_check
      _
    $region7: #{tpu_custom_call.1} parent=1 // pred_check_branch
      %23 = sbr.rel (0) target = $region9
    $region8: #{tpu_custom_call.1} parent=1 // pred_region
      %s25 = ssub.s32 256, 256
      %26 = vsyncadd [#allocation6], %s25
      %s27 = sshll.u32 [#allocation5], 4
      %s28 = int_to_ptr.vmem [resolvable:$true] %s27
      %33 = dma.hbm_to_vmem [thread:$0]  %s1, 256, %s28, [#allocation6], 128, 128, 8
    $region9: #{tpu_custom_call.1} parent=1 // pred_fallthru
      _
    // Predicated region
    $region10: #{tpu_custom_call.1} parent=1 // pred_check
      _
    $region11: #{tpu_custom_call.1} parent=1 // pred_check_branch
      %35 = sbr.rel (0) target = $region13
    $region12: #{tpu_custom_call.1} parent=1 // pred_region
      %36 = dma.done [#allocation3], 256
    $region13: #{tpu_custom_call.1} parent=1 // pred_fallthru
      _
    // Predicated region
    $region14: #{tpu_custom_call.1} parent=1 // pred_check
      _
    $region15: #{tpu_custom_call.1} parent=1 // pred_check_branch
      %38 = sbr.rel (0) target = $region17
    $region16: #{tpu_custom_call.1} parent=1 // pred_region
      %39 = dma.done [#allocation6], 256
    $region17: #{tpu_custom_call.1} parent=1 // pred_fallthru
      _
    %v40 = vld [vmem:[#allocation2] sm:$0xff]
    %v41 = vld [vmem:[#allocation2 + $0x8] sm:$0xff]
    %v42 = vld [vmem:[#allocation5] sm:$0xff]
    %v43 = vld [vmem:[#allocation5 + $0x8] sm:$0xff]
    %v44 = vlog2.pop %v40
    %v45 = vmul.f32 %v44, 0.6931472
    %v46 = vlog2.pop %v41
    %v47 = vmul.f32 %v46, 0.6931472
    %v48 = vmax.f32 %v45, -100.0
    %v49 = vmax.f32 %v47, -100.0
    %v50 = vsub.f32 1.0, %v40
    %v51 = vsub.f32 1.0, %v41
    %v52 = vlog2.pop %v50
    %v53 = vmul.f32 %v52, 0.6931472
    %v54 = vlog2.pop %v51
    %v55 = vmul.f32 %v54, 0.6931472
    %v56 = vmax.f32 %v53, -100.0
    %v57 = vmax.f32 %v55, -100.0
    %v58 = vmul.f32 %v42, %v48
    %v59 = vmul.f32 %v43, %v49
    %v60 = vsub.f32 1.0, %v42
    %v61 = vsub.f32 1.0, %v43
    %v62 = vmul.f32 %v60, %v56
    %v63 = vmul.f32 %v61, %v57
    %v64 = vadd.f32 %v58, %v62
    %v65 = vadd.f32 %v59, %v63
    %v66 = vsub.f32 0.0, %v64
    %v67 = vsub.f32 0.0, %v65
    %v68 = vsub.f32 0.0, %v66
    %v69 = vsub.f32 0.0, %v67
    %v70 = vmul.f32 %v68, 1.442695
    %v71 = vpow.pop %v70
    %v72 = vmul.f32 %v69, 1.442695
    %v73 = vpow.pop %v72
    %v74 = vsub.f32 1.0, %v71
    %v75 = vsub.f32 1.0, %v73
    %v76 = vmul.f32 %v74, %v74
    %v77 = vmul.f32 %v75, %v75
    %v78 = vmul.f32 %v76, %v66
    %v79 = vmul.f32 %v77, %v67
    %v80 = vadd.f32 %v78, %v79
    %v81 = vrot.slane %v80, 4
    %v82 = vadd.f32 %v80, %v81
    %v83 = vrot.slane %v82, 2
    %v84 = vadd.f32 %v82, %v83
    %v85 = vrot.slane %v84, 1
    %v86 = vadd.f32 %v84, %v85
    %87 = vst [vmem:[#allocation7] sm:$0x1] %v86
    // Predicated region
    $region18: #{tpu_custom_call.1} parent=1 // pred_check
      _
    $region19: #{tpu_custom_call.1} parent=1 // pred_check_branch
      %89 = sbr.rel (0) target = $region21
    $region20: #{tpu_custom_call.1} parent=1 // pred_region
      %s91 = ssub.s32 16, 16
      %92 = vsyncadd [#allocation4], %s91
      %s94 = sshll.u32 [#allocation7], 4
      %s95 = int_to_ptr.vmem [resolvable:$true] %s94
      %97 = dma.vmem_to_hbm [thread:$0]  %s95, 16, %s2, [#allocation4]
    $region21: #{tpu_custom_call.1} parent=1 // pred_fallthru
      _
    // Predicated region
    $region22: #{tpu_custom_call.1} parent=1 // pred_check
      _
    $region23: #{tpu_custom_call.1} parent=1 // pred_check_branch
      %99 = sbr.rel (0) target = $region25
    $region24: #{tpu_custom_call.1} parent=1 // pred_region
      %100 = dma.done [#allocation4], 16
    $region25: #{tpu_custom_call.1} parent=1 // pred_fallthru
      _
    %101 = vsyncpa [#allocation3], 1
    %102 = vsyncpa [#allocation6], 1
    %103 = vsyncpa [#allocation4], 1

</llo_original>
